<compile_context>
chip_gen: v6e
topology: v6e:2x2x1
jax: 0.10.0
libtpu: 0.0.40
codegen_flags: <defaults>
</compile_context>

<pallas_src>
import math
import jax
import jax.numpy as jnp
from jax import lax
from jax.experimental import pallas as pl
from jax.experimental.pallas import tpu as pltpu


def _round_up(v, m):
    return (v + m - 1) // m * m


def _lorentz_linear(h_in, w, b, exp_scale, is_time):
    """One LorentzLinear layer on a (tm, Cp) tile.

    h     = h_in @ w + b          (w pre-transposed to (C_in, C_out), bf16)
    time  = sigmoid(h[:, 0:1]) * exp_scale + 1.1
    s     = (time^2 - 1) / clamp_min(sum(h[:, 1:]^2, -1), 1e-8)
    out   = concat([time, h[:, 1:] * sqrt(s)], -1)
    A lane-index mask is used instead of lane-offset slicing.
    """
    h = jnp.dot(h_in, w, preferred_element_type=jnp.float32) + b
    # Extract the time column first, then apply the transcendental so the EUP
    # only processes (tm, 1) elements instead of (tm, Cp).
    t0 = jnp.sum(jnp.where(is_time, h, 0.0), axis=-1, keepdims=True)
    time = jax.nn.sigmoid(t0) * exp_scale + 1.1
    # Squared norm of the spatial part (padded channels are exactly zero).
    ss = jnp.sum(jnp.where(is_time, 0.0, h * h), axis=-1, keepdims=True)
    ss = jnp.maximum(ss, 1e-8)
    scale = (time * time - 1.0) / ss
    return jnp.where(is_time, time, h * jnp.sqrt(scale))


def ffn_lorentz_kernel(scales_ref, x_ref, w1_ref, b1_ref, w2_ref, b2_ref, o_ref):
    x = x_ref[...]
    x_f32 = x.astype(jnp.float32)
    exp_s1 = scales_ref[0]        # exp(log_scale), precomputed in the wrapper
    exp_s2 = scales_ref[1]
    # Hoisted lane mask, shared by both LorentzLinear layers.
    col = lax.broadcasted_iota(jnp.int32, x_f32.shape, 1)
    is_time = col == 0
    h1 = _lorentz_linear(x.astype(jnp.bfloat16), w1_ref[...], b1_ref[...],
                         exp_s1, is_time)
    h2 = _lorentz_linear(h1.astype(jnp.bfloat16), w2_ref[...], b2_ref[...],
                         exp_s2, is_time)
    o_ref[...] = (h2 + x_f32).astype(o_ref.dtype)


def _footprint_bytes(tm, Cp):
    """Rough VMEM footprint for one pipeline configuration."""
    return (2 * 2 * tm * Cp * 4          # x and out tiles, double-buffered f32
            + 2 * 2 * Cp * Cp * 2        # w1 and w2 (bf16), double-buffered
            + 2 * 2 * Cp * 4             # b1 and b2
            + 3 * tm * Cp * 4)           # in-kernel f32 intermediates headroom


def _pick_tm(M, Cp, tm_max=512, budget=40 * 1024 * 1024):
    tm = _round_up(min(tm_max, _round_up(M, 8)), 8)
    while tm > 8 and _footprint_bytes(tm, Cp) > budget:
        tm = _round_up(max(tm // 2, 8), 8)
    return tm


def ffn_lorentz(x, w1, b1, s1, w2, b2, s2, *, tm=None):
    """x: (B, N, C). w1, w2: (C, C) PyTorch layout (out, in). b1, b2: (C,).
    s1, s2: scalar log-scale parameters of LorentzLinear."""
    B, N, C = x.shape
    M = B * N
    Cp = _round_up(C, 128)                       # lane-dense channel dim
    if tm is None:
        tm = _pick_tm(M, Cp)
    else:
        tm = _round_up(min(tm, _round_up(M, 8)), 8)
    Mp = _round_up(M, tm)                        # pad rows instead of asserting

    x2d = x.reshape(M, C)
    if Mp != M or Cp != C:
        x2d = jnp.pad(x2d, ((0, Mp - M), (0, Cp - C)))

    def prep_w(w):
        # nn.Linear computes x @ W.T + b -> pre-transpose to (in, out),
        # zero-pad, and ship in bf16 (MXU-native, halves weight DMA bytes).
        wt = jnp.asarray(w, jnp.float32).T
        if Cp != C:
            wt = jnp.pad(wt, ((0, Cp - C), (0, Cp - C)))
        return wt.astype(jnp.bfloat16)

    def prep_b(b):
        b2d = jnp.asarray(b, jnp.float32).reshape(1, C)
        if Cp != C:
            b2d = jnp.pad(b2d, ((0, 0), (0, Cp - C)))
        return b2d

    w1_t, w2_t = prep_w(w1), prep_w(w2)
    b1_2d, b2_2d = prep_b(b1), prep_b(b2)
    # exp() hoisted out of the kernel; scalars live in SMEM via scalar prefetch.
    scales = jnp.exp(jnp.stack([jnp.asarray(s1, jnp.float32),
                                jnp.asarray(s2, jnp.float32)]))

    vmem_bytes = _footprint_bytes(tm, Cp)
    vmem_limit = int(min(max(vmem_bytes + (4 << 20), 16 << 20), 56 << 20))

    out = pl.pallas_call(
        ffn_lorentz_kernel,
        out_shape=jax.ShapeDtypeStruct((Mp, Cp), x.dtype),
        grid_spec=pltpu.PrefetchScalarGridSpec(
            num_scalar_prefetch=1,              # scales -> SMEM
            grid=(Mp // tm,),
            in_specs=[
                pl.BlockSpec((tm, Cp), lambda i, s: (i, 0)),   # x tile
                pl.BlockSpec((Cp, Cp), lambda i, s: (0, 0)),   # w1 (in, out)
                pl.BlockSpec((1, Cp), lambda i, s: (0, 0)),    # b1
                pl.BlockSpec((Cp, Cp), lambda i, s: (0, 0)),   # w2 (in, out)
                pl.BlockSpec((1, Cp), lambda i, s: (0, 0)),    # b2
            ],
            out_specs=pl.BlockSpec((tm, Cp), lambda i, s: (i, 0)),
        ),
        compiler_params=pltpu.CompilerParams(
            dimension_semantics=("parallel",),
            vmem_limit_bytes=vmem_limit,
        ),
    )(scales, x2d, w1_t, b1_2d, w2_t, b2_2d)

    if Mp != M or Cp != C:
        out = out[:M, :C]
    return out.reshape(B, N, C)


def _lorentz_linear_ref(x, w, b, log_scale):
    """Pure-JAX f32 reference of LorentzLinear (eval mode, no dropout)."""
    h = x @ w.T + b
    x_narrow = h[..., 1:]
    time = jax.nn.sigmoid(h[..., 0:1]) * jnp.exp(log_scale) + 1.1
    denom = jnp.maximum(jnp.sum(x_narrow * x_narrow, axis=-1, keepdims=True), 1e-8)
    scale = (time * time - 1.0) / denom
    return jnp.concatenate([time, x_narrow * jnp.sqrt(scale)], axis=-1)


def ffn_lorentz_ref(x, w1, b1, s1, w2, b2, s2):
    temp = x
    h = _lorentz_linear_ref(x, w1, b1, s1)
    h = _lorentz_linear_ref(h, w2, b2, s2)
    return h + temp


if __name__ == "__main__":
    B, N, C = 2, 8, 32   # in_features = out_features = 32 (residual requires equality)

    key = jax.random.PRNGKey(0)
    kx, kw1, kb1, kw2, kb2 = jax.random.split(key, 5)

    x = jax.random.normal(kx, (B, N, C), dtype=jnp.float32)
    # deterministic synthetic parameters (shapes match nn.Linear(C, C, bias=True))
    w1 = jax.random.normal(kw1, (C, C), dtype=jnp.float32) * 0.05
    b1 = jax.random.normal(kb1, (C,), dtype=jnp.float32) * 0.01
    w2 = jax.random.normal(kw2, (C, C), dtype=jnp.float32) * 0.05
    b2 = jax.random.normal(kb2, (C,), dtype=jnp.float32) * 0.01
    s1 = jnp.asarray(math.log(10.0), jnp.float32)   # LorentzLinear.scale (log-scale param)
    s2 = jnp.asarray(math.log(10.0), jnp.float32)

    out = ffn_lorentz(x, w1, b1, s1, w2, b2, s2)
    out = jax.block_until_ready(out)

    ref = ffn_lorentz_ref(x, w1, b1, s1, w2, b2, s2)
    assert out.shape == (B, N, C)
    # Tolerance loosened vs. the f32 reference because the MXU operands are bf16
    # (accumulation stays f32, so the Lorentz normalization remains stable).
    assert jnp.allclose(out, ref, atol=5e-2, rtol=5e-2), "mismatch vs reference"

    print("KERNEL_OK")
</pallas_src>

<mosaic_0001>
module attributes {stable_mosaic.version = 11 : i64} {
  func.func @ffn_lorentz_kernel(%arg0: i32, %arg1: memref<2xf32, #tpu.memory_space<smem>>, %arg2: memref<16x128xf32, #tpu.memory_space<vmem>>, %arg3: memref<128x128xbf16, #tpu.memory_space<vmem>>, %arg4: memref<1x128xf32, #tpu.memory_space<vmem>>, %arg5: memref<128x128xbf16, #tpu.memory_space<vmem>>, %arg6: memref<1x128xf32, #tpu.memory_space<vmem>>, %arg7: memref<16x128xf32, #tpu.memory_space<vmem>>) attributes {dimension_semantics = [#tpu.dimension_semantics<parallel>], iteration_bounds = array<i64: 1>, scalar_prefetch = 1 : i64, scratch_operands = 0 : i64, tpu.core_type = #tpu.core_type<tc>, window_params = [{transform_indices = @transform_0, window_bounds = array<i64: 16, 128>}, {pipeline_mode = #tpu.pipeline_mode<synchronous>, transform_indices = @transform_1, window_bounds = array<i64: 128, 128>}, {pipeline_mode = #tpu.pipeline_mode<synchronous>, transform_indices = @transform_2, window_bounds = array<i64: 1, 128>}, {pipeline_mode = #tpu.pipeline_mode<synchronous>, transform_indices = @transform_3, window_bounds = array<i64: 128, 128>}, {pipeline_mode = #tpu.pipeline_mode<synchronous>, transform_indices = @transform_4, window_bounds = array<i64: 1, 128>}, {transform_indices = @transform_5, window_bounds = array<i64: 16, 128>}]} {
    %c0 = arith.constant 0 : index
    %c0_0 = arith.constant 0 : index
    %0 = vector.load %arg2[%c0, %c0_0] : memref<16x128xf32, #tpu.memory_space<vmem>>, vector<16x128xf32>
    %c0_1 = arith.constant 0 : index
    %1 = memref.load %arg1[%c0_1] : memref<2xf32, #tpu.memory_space<smem>>
    %c1 = arith.constant 1 : index
    %2 = memref.load %arg1[%c1] : memref<2xf32, #tpu.memory_space<smem>>
    %3 = tpu.iota {dimensions = array<i32: 1>} : vector<16x128xi32>
    %c0_i32 = arith.constant 0 : i32
    %4 = vector.broadcast %c0_i32 : i32 to vector<16x128xi32>
    %5 = arith.cmpi eq, %3, %4 : vector<16x128xi32>
    %6 = arith.truncf %0 : vector<16x128xf32> to vector<16x128xbf16>
    %c0_2 = arith.constant 0 : index
    %c0_3 = arith.constant 0 : index
    %7 = vector.load %arg3[%c0_2, %c0_3] : memref<128x128xbf16, #tpu.memory_space<vmem>>, vector<128x128xbf16>
    %c0_4 = arith.constant 0 : index
    %c0_5 = arith.constant 0 : index
    %8 = vector.load %arg4[%c0_4, %c0_5] : memref<1x128xf32, #tpu.memory_space<vmem>>, vector<1x128xf32>
    %cst = arith.constant dense<0.000000e+00> : vector<16x128xf32>
    %9 = tpu.matmul %6, %7, %cst {dimension_numbers = #tpu.dot_dimension_numbers<[1], [0], [0], [1], [0, 0, 1, 1], [], []>} : vector<16x128xbf16>, vector<128x128xbf16>, vector<16x128xf32> -> vector<16x128xf32>
    %10 = vector.broadcast %8 : vector<1x128xf32> to vector<16x128xf32>
    %11 = arith.addf %9, %10 : vector<16x128xf32>
    %cst_6 = arith.constant 0.000000e+00 : f32
    %12 = vector.broadcast %cst_6 : f32 to vector<16x128xf32>
    %13 = arith.select %5, %11, %12 : vector<16x128xi1>, vector<16x128xf32>
    %cst_7 = arith.constant dense<0.000000e+00> : vector<16xf32>
    %14 = vector.multi_reduction <add>, %13, %cst_7 [1] : vector<16x128xf32> to vector<16xf32>
    %15 = vector.shape_cast %14 : vector<16xf32> to vector<16x1xf32>
    %16 = arith.negf %15 : vector<16x1xf32>
    %17 = math.exp %16 : vector<16x1xf32>
    %cst_8 = arith.constant 1.000000e+00 : f32
    %18 = vector.broadcast %cst_8 : f32 to vector<16x1xf32>
    %19 = arith.addf %18, %17 : vector<16x1xf32>
    %20 = arith.divf %18, %19 : vector<16x1xf32>
    %21 = vector.broadcast %1 : f32 to vector<16x1xf32>
    %22 = arith.mulf %20, %21 : vector<16x1xf32>
    %cst_9 = arith.constant 1.100000e+00 : f32
    %23 = vector.broadcast %cst_9 : f32 to vector<16x1xf32>
    %24 = arith.addf %22, %23 : vector<16x1xf32>
    %25 = arith.mulf %11, %11 : vector<16x128xf32>
    %cst_10 = arith.constant 0.000000e+00 : f32
    %26 = vector.broadcast %cst_10 : f32 to vector<16x128xf32>
    %27 = arith.select %5, %26, %25 : vector<16x128xi1>, vector<16x128xf32>
    %cst_11 = arith.constant dense<0.000000e+00> : vector<16xf32>
    %28 = vector.multi_reduction <add>, %27, %cst_11 [1] : vector<16x128xf32> to vector<16xf32>
    %29 = vector.shape_cast %28 : vector<16xf32> to vector<16x1xf32>
    %cst_12 = arith.constant 9.99999993E-9 : f32
    %30 = vector.broadcast %cst_12 : f32 to vector<16x1xf32>
    %31 = arith.maximumf %29, %30 : vector<16x1xf32>
    %32 = arith.mulf %24, %24 : vector<16x1xf32>
    %cst_13 = arith.constant 1.000000e+00 : f32
    %33 = vector.broadcast %cst_13 : f32 to vector<16x1xf32>
    %34 = arith.subf %32, %33 : vector<16x1xf32>
    %35 = arith.divf %34, %31 : vector<16x1xf32>
    %36 = math.sqrt %35 : vector<16x1xf32>
    %37 = vector.broadcast %36 : vector<16x1xf32> to vector<16x128xf32>
    %38 = arith.mulf %11, %37 : vector<16x128xf32>
    %39 = vector.shape_cast %24 : vector<16x1xf32> to vector<16x1xf32>
    %40 = vector.broadcast %39 : vector<16x1xf32> to vector<16x128xf32>
    %41 = arith.select %5, %40, %38 : vector<16x128xi1>, vector<16x128xf32>
    %42 = arith.truncf %41 : vector<16x128xf32> to vector<16x128xbf16>
    %c0_14 = arith.constant 0 : index
    %c0_15 = arith.constant 0 : index
    %43 = vector.load %arg5[%c0_14, %c0_15] : memref<128x128xbf16, #tpu.memory_space<vmem>>, vector<128x128xbf16>
    %c0_16 = arith.constant 0 : index
    %c0_17 = arith.constant 0 : index
    %44 = vector.load %arg6[%c0_16, %c0_17] : memref<1x128xf32, #tpu.memory_space<vmem>>, vector<1x128xf32>
    %cst_18 = arith.constant dense<0.000000e+00> : vector<16x128xf32>
    %45 = tpu.matmul %42, %43, %cst_18 {dimension_numbers = #tpu.dot_dimension_numbers<[1], [0], [0], [1], [0, 0, 1, 1], [], []>} : vector<16x128xbf16>, vector<128x128xbf16>, vector<16x128xf32> -> vector<16x128xf32>
    %46 = vector.broadcast %44 : vector<1x128xf32> to vector<16x128xf32>
    %47 = arith.addf %45, %46 : vector<16x128xf32>
    %cst_19 = arith.constant 0.000000e+00 : f32
    %48 = vector.broadcast %cst_19 : f32 to vector<16x128xf32>
    %49 = arith.select %5, %47, %48 : vector<16x128xi1>, vector<16x128xf32>
    %cst_20 = arith.constant dense<0.000000e+00> : vector<16xf32>
    %50 = vector.multi_reduction <add>, %49, %cst_20 [1] : vector<16x128xf32> to vector<16xf32>
    %51 = vector.shape_cast %50 : vector<16xf32> to vector<16x1xf32>
    %52 = arith.negf %51 : vector<16x1xf32>
    %53 = math.exp %52 : vector<16x1xf32>
    %cst_21 = arith.constant 1.000000e+00 : f32
    %54 = vector.broadcast %cst_21 : f32 to vector<16x1xf32>
    %55 = arith.addf %54, %53 : vector<16x1xf32>
    %56 = arith.divf %54, %55 : vector<16x1xf32>
    %57 = vector.broadcast %2 : f32 to vector<16x1xf32>
    %58 = arith.mulf %56, %57 : vector<16x1xf32>
    %cst_22 = arith.constant 1.100000e+00 : f32
    %59 = vector.broadcast %cst_22 : f32 to vector<16x1xf32>
    %60 = arith.addf %58, %59 : vector<16x1xf32>
    %61 = arith.mulf %47, %47 : vector<16x128xf32>
    %cst_23 = arith.constant 0.000000e+00 : f32
    %62 = vector.broadcast %cst_23 : f32 to vector<16x128xf32>
    %63 = arith.select %5, %62, %61 : vector<16x128xi1>, vector<16x128xf32>
    %cst_24 = arith.constant dense<0.000000e+00> : vector<16xf32>
    %64 = vector.multi_reduction <add>, %63, %cst_24 [1] : vector<16x128xf32> to vector<16xf32>
    %65 = vector.shape_cast %64 : vector<16xf32> to vector<16x1xf32>
    %cst_25 = arith.constant 9.99999993E-9 : f32
    %66 = vector.broadcast %cst_25 : f32 to vector<16x1xf32>
    %67 = arith.maximumf %65, %66 : vector<16x1xf32>
    %68 = arith.mulf %60, %60 : vector<16x1xf32>
    %cst_26 = arith.constant 1.000000e+00 : f32
    %69 = vector.broadcast %cst_26 : f32 to vector<16x1xf32>
    %70 = arith.subf %68, %69 : vector<16x1xf32>
    %71 = arith.divf %70, %67 : vector<16x1xf32>
    %72 = math.sqrt %71 : vector<16x1xf32>
    %73 = vector.broadcast %72 : vector<16x1xf32> to vector<16x128xf32>
    %74 = arith.mulf %47, %73 : vector<16x128xf32>
    %75 = vector.shape_cast %60 : vector<16x1xf32> to vector<16x1xf32>
    %76 = vector.broadcast %75 : vector<16x1xf32> to vector<16x128xf32>
    %77 = arith.select %5, %76, %74 : vector<16x128xi1>, vector<16x128xf32>
    %78 = arith.addf %77, %0 : vector<16x128xf32>
    %c0_27 = arith.constant 0 : index
    %c0_28 = arith.constant 0 : index
    %79 = vector.load %arg7[%c0_27, %c0_28] : memref<16x128xf32, #tpu.memory_space<vmem>>, vector<16x128xf32>
    tpu.vector_store %arg7[%c0_27, %c0_28], %78 {strides = array<i32>} : memref<16x128xf32, #tpu.memory_space<vmem>>, vector<16x128xf32>,
    return
  }
  func.func @transform_0(%arg0: i32, %arg1: memref<2xf32, #tpu.memory_space<smem>>) -> (i32, i32) {
    %c0_i32 = arith.constant 0 : i32
    %c0_i32_0 = arith.constant 0 : i32
    return %arg0, %c0_i32 : i32, i32
  }
  func.func @transform_1(%arg0: i32, %arg1: memref<2xf32, #tpu.memory_space<smem>>) -> (i32, i32) {
    %c0_i32 = arith.constant 0 : i32
    %c0_i32_0 = arith.constant 0 : i32
    %c0_i32_1 = arith.constant 0 : i32
    return %c0_i32, %c0_i32_0 : i32, i32
  }
  func.func @transform_2(%arg0: i32, %arg1: memref<2xf32, #tpu.memory_space<smem>>) -> (i32, i32) {
    %c0_i32 = arith.constant 0 : i32
    %c0_i32_0 = arith.constant 0 : i32
    %c0_i32_1 = arith.constant 0 : i32
    return %c0_i32, %c0_i32_0 : i32, i32
  }
  func.func @transform_3(%arg0: i32, %arg1: memref<2xf32, #tpu.memory_space<smem>>) -> (i32, i32) {
    %c0_i32 = arith.constant 0 : i32
    %c0_i32_0 = arith.constant 0 : i32
    %c0_i32_1 = arith.constant 0 : i32
    return %c0_i32, %c0_i32_0 : i32, i32
  }
  func.func @transform_4(%arg0: i32, %arg1: memref<2xf32, #tpu.memory_space<smem>>) -> (i32, i32) {
    %c0_i32 = arith.constant 0 : i32
    %c0_i32_0 = arith.constant 0 : i32
    %c0_i32_1 = arith.constant 0 : i32
    return %c0_i32, %c0_i32_0 : i32, i32
  }
  func.func @transform_5(%arg0: i32, %arg1: memref<2xf32, #tpu.memory_space<smem>>) -> (i32, i32) {
    %c0_i32 = arith.constant 0 : i32
    %c0_i32_0 = arith.constant 0 : i32
    return %arg0, %c0_i32 : i32, i32
  }
}

</mosaic_0001>

<llo_original>
// kernel: tpu_custom_call.1
$region0: #{tpu_custom_call.1}
  #allocation0 [shape = 'u32[]', space=smem, size = 0x4, offset = 0x4, fixed_abs, tag = 'smem constant byte address 0x4 - core index']
  #allocation1 [shape = 'u32[144,128]{1,0:T(1,128)}', space=vmem, size = 0x12000, scoped, tag = 'internal scratch']
  #allocation2 [shape = 's32[1]{0}', space=sflag, size = 0x4, scoped, tag = 'scoped memory for tpu_custom_call.1']
  #allocation3 [shape = 'u8[512]{0}', space=smem, size = 0x200, scoped, tag = 'prefetched SMEM operand 0']
  %s0 = inlined_call_operand.hbm [shape: f32[2], index: 0, kind: input, shape index: {}]
  %s1 = inlined_call_operand.hbm [shape: f32[16,128], index: 1, kind: input, shape index: {}]
  %s2 = inlined_call_operand.hbm [shape: bf16[128,128], index: 2, kind: input, shape index: {}]
  %s3 = inlined_call_operand.vmem [shape: f32[1,128], index: 3, kind: input, shape index: {}]
  %s4 = inlined_call_operand.hbm [shape: bf16[128,128], index: 4, kind: input, shape index: {}]
  %s5 = inlined_call_operand.vmem [shape: f32[1,128], index: 5, kind: input, shape index: {}]
  %s6 = inlined_call_operand.hbm [shape: f32[16,128], index: 6, kind: output, shape index: {}]
  %s7 = sld [smem:[#allocation0]]
  $region42: #{tpu_custom_call.1} parent=0
    _
  %s9 = ssub.s32 1, %s7
  %s10 = scalar_select 0, %s9, %s7
  %12 = dma.hbm_to_smem %s0, 16, [#allocation3], [#allocation2]
  %13 = dma.done [#allocation2], 16
  %14 = sfence
  $region1: #{tpu_custom_call.1} parent=0
    #allocation4 [shape = 'u8[8192]{0}', space=vmem, size = 0x2000, scoped, tag = 'input window, operand 1, single buffered']
    #allocation5 [shape = 's32[1]{0}', space=sflag, size = 0x4, scoped, tag = 'scoped memory for tpu_custom_call.1']
    #allocation6 [shape = 's32[1]{0}', space=sflag, size = 0x4, scoped, tag = 'scoped memory for tpu_custom_call.1']
    #allocation7 [shape = 'u8[32768]{0}', space=vmem, size = 0x8000, scoped, tag = 'input window, operand 2, single buffered']
    #allocation8 [shape = 's32[1]{0}', space=sflag, size = 0x4, scoped, tag = 'scoped memory for tpu_custom_call.1']
    #allocation9 [shape = 'u8[32768]{0}', space=vmem, size = 0x8000, scoped, tag = 'input window, operand 4, single buffered']
    #allocation10 [shape = 'u8[8192]{0}', space=vmem, size = 0x2000, scoped, tag = 'output window, operand 0, single buffered']
    %15 = vsyncpa [#allocation5], 0
    %16 = vsyncpa [#allocation8], 0
    %17 = vsyncpa [#allocation6], 0
    // Predicated region
    $region2: #{tpu_custom_call.1} parent=1 // pred_check
      _
    $region3: #{tpu_custom_call.1} parent=1 // pred_check_branch
      %19 = sbr.rel (0) target = $region5
    $region4: #{tpu_custom_call.1} parent=1 // pred_region
      %s21 = ssub.s32 256, 256
      %22 = vsyncadd [#allocation5], %s21
      %s23 = sshll.u32 [#allocation4], 4
      %s24 = int_to_ptr.vmem [resolvable:$true] %s23
      %29 = dma.hbm_to_vmem [thread:$0]  %s1, 256, %s24, [#allocation5], 128, 128, 8
    $region5: #{tpu_custom_call.1} parent=1 // pred_fallthru
      _
    // Predicated region
    $region6: #{tpu_custom_call.1} parent=1 // pred_check
      _
    $region7: #{tpu_custom_call.1} parent=1 // pred_check_branch
      %31 = sbr.rel (0) target = $region9
    $region8: #{tpu_custom_call.1} parent=1 // pred_region
      %s33 = ssub.s32 1024, 1024
      %34 = vsyncadd [#allocation8], %s33
      %s35 = sshll.u32 [#allocation7], 4
      %s36 = int_to_ptr.vmem [resolvable:$true] %s35
      %41 = dma.hbm_to_vmem [thread:$0]  %s2, 1024, %s36, [#allocation8], 64, 64, 4
    $region9: #{tpu_custom_call.1} parent=1 // pred_fallthru
      _
    // Predicated region
    $region10: #{tpu_custom_call.1} parent=1 // pred_check
      _
    $region11: #{tpu_custom_call.1} parent=1 // pred_check_branch
      %43 = sbr.rel (0) target = $region13
    $region12: #{tpu_custom_call.1} parent=1 // pred_region
      _
    $region13: #{tpu_custom_call.1} parent=1 // pred_fallthru
      _
    // Predicated region
    $region14: #{tpu_custom_call.1} parent=1 // pred_check
      _
    $region15: #{tpu_custom_call.1} parent=1 // pred_check_branch
      %45 = sbr.rel (0) target = $region17
    $region16: #{tpu_custom_call.1} parent=1 // pred_region
      %s47 = ssub.s32 1024, 1024
      %48 = vsyncadd [#allocation8], %s47
      %s49 = sshll.u32 [#allocation9], 4
      %s50 = int_to_ptr.vmem [resolvable:$true] %s49
      %55 = dma.hbm_to_vmem [thread:$0]  %s4, 1024, %s50, [#allocation8], 64, 64, 4
    $region17: #{tpu_custom_call.1} parent=1 // pred_fallthru
      _
    // Predicated region
    $region18: #{tpu_custom_call.1} parent=1 // pred_check
      _
    $region19: #{tpu_custom_call.1} parent=1 // pred_check_branch
      %57 = sbr.rel (0) target = $region21
    $region20: #{tpu_custom_call.1} parent=1 // pred_region
      _
    $region21: #{tpu_custom_call.1} parent=1 // pred_fallthru
      _
    // Predicated region
    $region22: #{tpu_custom_call.1} parent=1 // pred_check
      _
    $region23: #{tpu_custom_call.1} parent=1 // pred_check_branch
      %59 = sbr.rel (0) target = $region25
    $region24: #{tpu_custom_call.1} parent=1 // pred_region
      %60 = dma.done [#allocation5], 256
    $region25: #{tpu_custom_call.1} parent=1 // pred_fallthru
      _
    // Predicated region
    $region26: #{tpu_custom_call.1} parent=1 // pred_check
      _
    $region27: #{tpu_custom_call.1} parent=1 // pred_check_branch
      %62 = sbr.rel (0) target = $region29
    $region28: #{tpu_custom_call.1} parent=1 // pred_region
      %63 = dma.done [#allocation8], 1024
    $region29: #{tpu_custom_call.1} parent=1 // pred_fallthru
      _
    // Predicated region
    $region30: #{tpu_custom_call.1} parent=1 // pred_check
      _
    $region31: #{tpu_custom_call.1} parent=1 // pred_check_branch
      %65 = sbr.rel (0) target = $region33
    $region32: #{tpu_custom_call.1} parent=1 // pred_region
      %66 = dma.done [#allocation8], 1024
    $region33: #{tpu_custom_call.1} parent=1 // pred_fallthru
      _
    %v68 = vld [vmem:[#allocation4] sm:$0xff]
    %v69 = vld [vmem:[#allocation4 + $0x8] sm:$0xff]
    %s70 = sld [smem:[#allocation3]]
    %s71 = sld [smem:[#allocation3 + $0x1]]
    %v72 = vlaneseq
    %v73 = vand.u32 %v72, 127
    %vm74 = vcmp.eq.s32.totalorder %v73, 0
    %v75 = vpack.c.bf16 %v69, %v68
    %v76 = vld [vmem:[#allocation7] sm:$0xf]
    %v77 = vld [vmem:[#allocation7 + $0x4] sm:$0xf]
    %v78 = vld [vmem:[#allocation7 + $0x8] sm:$0xf]
    %v79 = vld [vmem:[#allocation7 + $0xc] sm:$0xf]
    %v80 = vld [vmem:[#allocation7 + $0x10] sm:$0xf]
    %v81 = vld [vmem:[#allocation7 + $0x14] sm:$0xf]
    %v82 = vld [vmem:[#allocation7 + $0x18] sm:$0xf]
    %v83 = vld [vmem:[#allocation7 + $0x1c] sm:$0xf]
    %v84 = vld [vmem:[#allocation7 + $0x20] sm:$0xf]
    %v85 = vld [vmem:[#allocation7 + $0x24] sm:$0xf]
    %v86 = vld [vmem:[#allocation7 + $0x28] sm:$0xf]
    %v87 = vld [vmem:[#allocation7 + $0x2c] sm:$0xf]
    %v88 = vld [vmem:[#allocation7 + $0x30] sm:$0xf]
    %v89 = vld [vmem:[#allocation7 + $0x34] sm:$0xf]
    %v90 = vld [vmem:[#allocation7 + $0x38] sm:$0xf]
    %v91 = vld [vmem:[#allocation7 + $0x3c] sm:$0xf]
    %v92 = vld [vmem:[%s3] sm:$0x1]
    %v94 = vlaneseq
    %v95 = vshrl.u32 %v94, 7
    %v96 = vsub.s32 0, %v95
    %v97 = vrot.slane %v92, %v96
    %v115 = vunpack.c.l.b16 %v76
    %v116 = vunpack.c.l.b16 %v77
    %v117 = vunpack.c.l.b16 %v78
    %v118 = vunpack.c.l.b16 %v79
    %v119 = vunpack.c.l.b16 %v80
    %v120 = vunpack.c.l.b16 %v81
    %v121 = vunpack.c.l.b16 %v82
    %v122 = vunpack.c.l.b16 %v83
    %v123 = vunpack.c.l.b16 %v84
    %v124 = vunpack.c.l.b16 %v85
    %v125 = vunpack.c.l.b16 %v86
    %v126 = vunpack.c.l.b16 %v87
    %v127 = vunpack.c.l.b16 %v88
    %v128 = vunpack.c.l.b16 %v89
    %v129 = vunpack.c.l.b16 %v90
    %v130 = vunpack.c.l.b16 %v91
    %v131 = vpack.c.b16 %v116, %v115
    %v132 = vpack.c.b16 %v118, %v117
    %v133 = vpack.c.b16 %v120, %v119
    %v134 = vpack.c.b16 %v122, %v121
    %v135 = vpack.c.b16 %v124, %v123
    %v136 = vpack.c.b16 %v126, %v125
    %v137 = vpack.c.b16 %v128, %v127
    %v138 = vpack.c.b16 %v130, %v129
    %147 = vmatprep.subr.bf16.mxu0 0
    %148 = vmatpush1.bf16.msra.mxu0 %v138
    %149 = vmatprep.subr.bf16.mxu0 0
    %150 = vmatpush1.bf16.msra.mxu0 %v137
    %151 = vmatprep.subr.bf16.mxu0 0
    %152 = vmatpush1.bf16.msra.mxu0 %v136
    %153 = vmatprep.subr.bf16.mxu0 0
    %154 = vmatpush1.bf16.msra.mxu0 %v135
    %155 = vmatprep.subr.bf16.mxu0 0
    %156 = vmatpush1.bf16.msra.mxu0 %v134
    %157 = vmatprep.subr.bf16.mxu0 0
    %158 = vmatpush1.bf16.msra.mxu0 %v133
    %159 = vmatprep.subr.bf16.mxu0 0
    %160 = vmatpush1.bf16.msra.mxu0 %v132
    %161 = vmatprep.subr.bf16.mxu0 0
    %162 = vmatpush1.bf16.msra.mxu0 %v131
    %163 = vmatprep.subr.bf16.mxu0 0
    %164 = vmatpush2.bf16.msra.mxu0 0
    %165 = vmatprep.subr.bf16.mxu0 0
    %166 = vmatpush2.bf16.msra.mxu0 0
    %167 = vmatprep.subr.bf16.mxu0 0
    %168 = vmatpush2.bf16.msra.mxu0 0
    %169 = vmatprep.subr.bf16.mxu0 0
    %170 = vmatpush2.bf16.msra.mxu0 0
    %171 = vmatprep.subr.bf16.mxu0 0
    %172 = vmatpush2.bf16.msra.mxu0 0
    %173 = vmatprep.subr.bf16.mxu0 0
    %174 = vmatpush2.bf16.msra.mxu0 0
    %175 = vmatprep.subr.bf16.mxu0 0
    %176 = vmatpush2.bf16.msra.mxu0 0
    %177 = vmatprep.subr.bf16.mxu0 0
    %178 = vmatpush2.bf16.msra.mxu0 0
    %179 = vmatprep.mubr.bf16.mxu0 0
    %180 = vmatmul.mubr.bf16.gmra.mxu0 %v75
    %v181 = vpop.f32.mrf.mxu0
    %v182 = vadd.f32 %v97, %v181
    %v183 = vpop.f32.mrf.mxu0
    %v184 = vpop.f32.mrf.mxu0
    %v185 = vadd.f32 %v97, %v184
    %v186 = vpop.f32.mrf.mxu0
    %187 = vdwg.mxu0
    %v188 = vsel %vm74, %v182, 0.0
    %v189 = vsel %vm74, %v185, 0.0
    %190 = vadd.xlane.f32.xlu0 %v188
    %v191 = vpop.xlane.xlu0 %190
    %192 = vadd.xlane.f32.xlu0 %v189
    %v193 = vpop.xlane.xlu0 %192
    %v194 = vxor.u32 %v191, 2147483648
    %v195 = vxor.u32 %v193, 2147483648
    %v196 = vmul.f32 %v194, 1.442695
    %v197 = vpow.pop %v196
    %v198 = vmul.f32 %v195, 1.442695
    %v199 = vpow.pop %v198
    %v200 = vadd.f32 %v197, 1.0
    %v201 = vadd.f32 %v199, 1.0
    %v202 = vrcp.pop %v200
    %v203 = vmul.f32 1.0, %v202
    %v204 = vrcp.pop %v201
    %v205 = vmul.f32 1.0, %v204
    %v206 = vstv %s70
    %v207 = vmul.f32 %v203, %v206
    %v208 = vmul.f32 %v205, %v206
    %v209 = vadd.f32 %v207, 1.1
    %v210 = vadd.f32 %v208, 1.1
    %v211 = vmul.f32 %v182, %v182
    %v212 = vmul.f32 %v185, %v185
    %v213 = vsel %vm74, 0.0, %v211
    %v214 = vsel %vm74, 0.0, %v212
    %215 = vadd.xlane.f32.xlu0 %v213
    %v216 = vpop.xlane.xlu0 %215
    %217 = vadd.xlane.f32.xlu0 %v214
    %v218 = vpop.xlane.xlu0 %217
    %v219 = vmax.f32 %v216, 1e-08
    %v220 = vmax.f32 %v218, 1e-08
    %v221 = vmul.f32 %v209, %v209
    %v222 = vmul.f32 %v210, %v210
    %v223 = vsub.f32 %v221, 1.0
    %v224 = vsub.f32 %v222, 1.0
    %v225 = vrcp.pop %v219
    %v226 = vmul.f32 %v223, %v225
    %v227 = vrcp.pop %v220
    %v228 = vmul.f32 %v224, %v227
    %v229 = vrsqrt.pop %v226
    %v230 = vmul.f32 %v226, %v229
    %vm231 = vcmp.eq.f32.partialorder %v226, inf
    %v232 = vsel %vm231, %v226, %v230
    %vm233 = vcmp.eq.f32.partialorder %v226, 0.0
    %v234 = vand.u32 %v226, 2147483648
    %v235 = vsel %vm233, %v234, %v232
    %v236 = vrsqrt.pop %v228
    %v237 = vmul.f32 %v228, %v236
    %vm238 = vcmp.eq.f32.partialorder %v228, inf
    %v239 = vsel %vm238, %v228, %v237
    %vm240 = vcmp.eq.f32.partialorder %v228, 0.0
    %v241 = vand.u32 %v228, 2147483648
    %v242 = vsel %vm240, %v241, %v239
    %v243 = vmul.f32 %v182, %v235
    %v244 = vmul.f32 %v185, %v242
    %v245 = vsel %vm74, %v209, %v243
    %v246 = vsel %vm74, %v210, %v244
    %v247 = vpack.c.bf16 %v246, %v245
    %v248 = vld [vmem:[#allocation9] sm:$0xf]
    %v249 = vld [vmem:[#allocation9 + $0x4] sm:$0xf]
    %v250 = vld [vmem:[#allocation9 + $0x8] sm:$0xf]
    %v251 = vld [vmem:[#allocation9 + $0xc] sm:$0xf]
    %v252 = vld [vmem:[#allocation9 + $0x10] sm:$0xf]
    %v253 = vld [vmem:[#allocation9 + $0x14] sm:$0xf]
    %v254 = vld [vmem:[#allocation9 + $0x18] sm:$0xf]
    %v255 = vld [vmem:[#allocation9 + $0x1c] sm:$0xf]
    %v256 = vld [vmem:[#allocation9 + $0x20] sm:$0xf]
    %v257 = vld [vmem:[#allocation9 + $0x24] sm:$0xf]
    %v258 = vld [vmem:[#allocation9 + $0x28] sm:$0xf]
    %v259 = vld [vmem:[#allocation9 + $0x2c] sm:$0xf]
    %v260 = vld [vmem:[#allocation9 + $0x30] sm:$0xf]
    %v261 = vld [vmem:[#allocation9 + $0x34] sm:$0xf]
    %v262 = vld [vmem:[#allocation9 + $0x38] sm:$0xf]
    %v263 = vld [vmem:[#allocation9 + $0x3c] sm:$0xf]
    %v264 = vld [vmem:[%s5] sm:$0x1]
    %v266 = vlaneseq
    %v267 = vshrl.u32 %v266, 7
    %v268 = vsub.s32 0, %v267
    %v269 = vrot.slane %v264, %v268
    %v287 = vunpack.c.l.b16 %v248
    %v288 = vunpack.c.l.b16 %v249
    %v289 = vunpack.c.l.b16 %v250
    %v290 = vunpack.c.l.b16 %v251
    %v291 = vunpack.c.l.b16 %v252
    %v292 = vunpack.c.l.b16 %v253
    %v293 = vunpack.c.l.b16 %v254
    %v294 = vunpack.c.l.b16 %v255
    %v295 = vunpack.c.l.b16 %v256
    %v296 = vunpack.c.l.b16 %v257
    %v297 = vunpack.c.l.b16 %v258
    %v298 = vunpack.c.l.b16 %v259
    %v299 = vunpack.c.l.b16 %v260
    %v300 = vunpack.c.l.b16 %v261
    %v301 = vunpack.c.l.b16 %v262
    %v302 = vunpack.c.l.b16 %v263
    %v303 = vpack.c.b16 %v288, %v287
    %v304 = vpack.c.b16 %v290, %v289
    %v305 = vpack.c.b16 %v292, %v291
    %v306 = vpack.c.b16 %v294, %v293
    %v307 = vpack.c.b16 %v296, %v295
    %v308 = vpack.c.b16 %v298, %v297
    %v309 = vpack.c.b16 %v300, %v299
    %v310 = vpack.c.b16 %v302, %v301
    %319 = vmatprep.subr.bf16.mxu0 0
    %320 = vmatpush1.bf16.msra.mxu0 %v310
    %321 = vmatprep.subr.bf16.mxu0 0
    %322 = vmatpush1.bf16.msra.mxu0 %v309
    %323 = vmatprep.subr.bf16.mxu0 0
    %324 = vmatpush1.bf16.msra.mxu0 %v308
    %325 = vmatprep.subr.bf16.mxu0 0
    %326 = vmatpush1.bf16.msra.mxu0 %v307
    %327 = vmatprep.subr.bf16.mxu0 0
    %328 = vmatpush1.bf16.msra.mxu0 %v306
    %329 = vmatprep.subr.bf16.mxu0 0
    %330 = vmatpush1.bf16.msra.mxu0 %v305
    %331 = vmatprep.subr.bf16.mxu0 0
    %332 = vmatpush1.bf16.msra.mxu0 %v304
    %333 = vmatprep.subr.bf16.mxu0 0
    %334 = vmatpush1.bf16.msra.mxu0 %v303
    %335 = vmatprep.subr.bf16.mxu0 0
    %336 = vmatpush2.bf16.msra.mxu0 0
    %337 = vmatprep.subr.bf16.mxu0 0
    %338 = vmatpush2.bf16.msra.mxu0 0
    %339 = vmatprep.subr.bf16.mxu0 0
    %340 = vmatpush2.bf16.msra.mxu0 0
    %341 = vmatprep.subr.bf16.mxu0 0
    %342 = vmatpush2.bf16.msra.mxu0 0
    %343 = vmatprep.subr.bf16.mxu0 0
    %344 = vmatpush2.bf16.msra.mxu0 0
    %345 = vmatprep.subr.bf16.mxu0 0
    %346 = vmatpush2.bf16.msra.mxu0 0
    %347 = vmatprep.subr.bf16.mxu0 0
    %348 = vmatpush2.bf16.msra.mxu0 0
    %349 = vmatprep.subr.bf16.mxu0 0
    %350 = vmatpush2.bf16.msra.mxu0 0
    %351 = vmatprep.mubr.bf16.mxu0 0
    %352 = vmatmul.mubr.bf16.gmra.mxu0 %v247
    %v353 = vpop.f32.mrf.mxu0
    %v354 = vadd.f32 %v269, %v353
    %v355 = vpop.f32.mrf.mxu0
    %v356 = vpop.f32.mrf.mxu0
    %v357 = vadd.f32 %v269, %v356
    %v358 = vpop.f32.mrf.mxu0
    %359 = vdwg.mxu0
    %v360 = vsel %vm74, %v354, 0.0
    %v361 = vsel %vm74, %v357, 0.0
    %362 = vadd.xlane.f32.xlu0 %v360
    %v363 = vpop.xlane.xlu0 %362
    %364 = vadd.xlane.f32.xlu0 %v361
    %v365 = vpop.xlane.xlu0 %364
    %v366 = vxor.u32 %v363, 2147483648
    %v367 = vxor.u32 %v365, 2147483648
    %v368 = vmul.f32 %v366, 1.442695
    %v369 = vpow.pop %v368
    %v370 = vmul.f32 %v367, 1.442695
    %v371 = vpow.pop %v370
    %v372 = vadd.f32 %v369, 1.0
    %v373 = vadd.f32 %v371, 1.0
    %v374 = vrcp.pop %v372
    %v375 = vmul.f32 1.0, %v374
    %v376 = vrcp.pop %v373
    %v377 = vmul.f32 1.0, %v376
    %v378 = vstv %s71
    %v379 = vmul.f32 %v375, %v378
    %v380 = vmul.f32 %v377, %v378
    %v381 = vadd.f32 %v379, 1.1
    %v382 = vadd.f32 %v380, 1.1
    %v383 = vmul.f32 %v354, %v354
    %v384 = vmul.f32 %v357, %v357
    %v385 = vsel %vm74, 0.0, %v383
    %v386 = vsel %vm74, 0.0, %v384
    %387 = vadd.xlane.f32.xlu0 %v385
    %v388 = vpop.xlane.xlu0 %387
    %389 = vadd.xlane.f32.xlu0 %v386
    %v390 = vpop.xlane.xlu0 %389
    %v391 = vmax.f32 %v388, 1e-08
    %v392 = vmax.f32 %v390, 1e-08
    %v393 = vmul.f32 %v381, %v381
    %v394 = vmul.f32 %v382, %v382
    %v395 = vsub.f32 %v393, 1.0
    %v396 = vsub.f32 %v394, 1.0
    %v397 = vrcp.pop %v391
    %v398 = vmul.f32 %v395, %v397
    %v399 = vrcp.pop %v392
    %v400 = vmul.f32 %v396, %v399
    %v401 = vrsqrt.pop %v398
    %v402 = vmul.f32 %v398, %v401
    %vm403 = vcmp.eq.f32.partialorder %v398, inf
    %v404 = vsel %vm403, %v398, %v402
    %vm405 = vcmp.eq.f32.partialorder %v398, 0.0
    %v406 = vand.u32 %v398, 2147483648
    %v407 = vsel %vm405, %v406, %v404
    %v408 = vrsqrt.pop %v400
    %v409 = vmul.f32 %v400, %v408
    %vm410 = vcmp.eq.f32.partialorder %v400, inf
    %v411 = vsel %vm410, %v400, %v409
    %vm412 = vcmp.eq.f32.partialorder %v400, 0.0
    %v413 = vand.u32 %v400, 2147483648
    %v414 = vsel %vm412, %v413, %v411
    %v415 = vmul.f32 %v354, %v407
    %v416 = vmul.f32 %v357, %v414
    %v417 = vsel %vm74, %v381, %v415
    %v418 = vsel %vm74, %v382, %v416
    %v419 = vadd.f32 %v417, %v68
    %v420 = vadd.f32 %v418, %v69
    %421 = vst [vmem:[#allocation10] sm:$0xff] %v419
    %422 = vst [vmem:[#allocation10 + $0x8] sm:$0xff] %v420
    // Predicated region
    $region34: #{tpu_custom_call.1} parent=1 // pred_check
      _
    $region35: #{tpu_custom_call.1} parent=1 // pred_check_branch
      %424 = sbr.rel (0) target = $region37
    $region36: #{tpu_custom_call.1} parent=1 // pred_region
      %s426 = ssub.s32 256, 256
      %427 = vsyncadd [#allocation6], %s426
      %s428 = sshll.u32 [#allocation10], 4
      %s429 = int_to_ptr.vmem [resolvable:$true] %s428
      %434 = dma.vmem_to_hbm [thread:$0]  %s429, 256, %s6, [#allocation6], 128, 128, 8
    $region37: #{tpu_custom_call.1} parent=1 // pred_fallthru
      _
    // Predicated region
    $region38: #{tpu_custom_call.1} parent=1 // pred_check
      _
    $region39: #{tpu_custom_call.1} parent=1 // pred_check_branch
      %436 = sbr.rel (0) target = $region41
    $region40: #{tpu_custom_call.1} parent=1 // pred_region
      %437 = dma.done [#allocation6], 256
    $region41: #{tpu_custom_call.1} parent=1 // pred_fallthru
      _
    %438 = vsyncpa [#allocation5], 1
    %439 = vsyncpa [#allocation8], 1
    %440 = vsyncpa [#allocation6], 1

</llo_original>
